<compile_context>
chip_gen: v6e
topology: v6e:2x2x1
jax: 0.10.0
libtpu: 0.0.40
codegen_flags: <defaults>
</compile_context>

<pallas_src>
import jax
import jax.numpy as jnp
from jax.experimental import pallas as pl
from jax.experimental.pallas import tpu as pltpu

N_EMBD = 32
DROPOUT = 0.1  # inference mode: identity

LANE = 128


def _round_up(x, m):
    return (x + m - 1) // m * m


def _block_diag(w, f, dtype):
    """blockdiag(w, ..., w) with f copies; w: (a, b) -> (f*a, f*b)."""
    a, b = w.shape
    out = jnp.zeros((f * a, f * b), dtype)
    for i in range(f):
        out = out.at[i * a:(i + 1) * a, i * b:(i + 1) * b].set(w.astype(dtype))
    return out


def prepare_ffn_params(w1, b1, w2, b2, compute_dtype=jnp.bfloat16):
    """One-time weight prep (hoist out of the per-call hot path).

    w1: (C, H), b1: (H,), w2: (H, C), b2: (C,)  (PyTorch W.T layout, H = 4*C).
    Builds fold-factor block-diagonal weights so activations can be read as
    lane-dense (M/f, f*C) rows with no HBM padding.
    """
    C, H = w1.shape
    assert w2.shape == (H, C) and b1.shape == (H,) and b2.shape == (C,)
    f = LANE // C if (C < LANE and LANE % C == 0) else 1
    return dict(
        f=f, C=C, H=H, compute_dtype=compute_dtype,
        w1=_block_diag(w1, f, compute_dtype),                      # (f*C, f*H)
        w2=_block_diag(w2, f, compute_dtype),                      # (f*H, f*C)
        b1=jnp.tile(b1.astype(jnp.float32), f).reshape(1, f * H),  # (1, f*H)
        b2=jnp.tile(b2.astype(jnp.float32), f).reshape(1, f * C),  # (1, f*C)
    )


def _ffn_kernel(x_ref, w1_ref, b1_ref, w2_ref, b2_ref, o_ref):
    # x_ref: (tm, W) input dtype; w*_ref: compute dtype; b*_ref: f32.
    x = x_ref[...].astype(w1_ref.dtype)            # in-kernel cast (VPU has slack)
    h = jnp.dot(x, w1_ref[...], preferred_element_type=jnp.float32)
    h = jnp.maximum(h + b1_ref[...], 0.0)          # bias + ReLU in f32
    h = h.astype(w2_ref.dtype)
    y = jnp.dot(h, w2_ref[...], preferred_element_type=jnp.float32)
    y = y + b2_ref[...]
    o_ref[...] = y.astype(o_ref.dtype)
    # TODO(synk): training-mode dropout (pltpu.prng_* + 1/(1-p) scale) goes here.


def feed_forward(x, w1=None, b1=None, w2=None, b2=None, *, params=None,
                 tm=None, compute_dtype=jnp.bfloat16):
    """Fused Linear->ReLU->Linear (+identity Dropout). x: (..., C), same out shape/dtype."""
    if params is None:
        params = prepare_ffn_params(w1, b1, w2, b2, compute_dtype=compute_dtype)

    orig_shape = x.shape
    out_dtype = x.dtype
    C, H, f = params["C"], params["H"], params["f"]
    W = f * C           # folded row width (128 when C divides 128)
    Hf = f * H          # folded hidden width

    x2d = x.reshape(-1, C)
    M = x2d.shape[0]
    mf_needed = pl.cdiv(M, f)

    # Folded-row tile: big enough to amortize ~0.35us/step pipeline overhead,
    # small enough that the M axis splits across >= 2 TensorCores (v7x).
    cdt_size = jnp.dtype(params["compute_dtype"]).itemsize
    if tm is None:
        cap = 2048 if cdt_size <= 2 else 1024
        tm = min(cap, _round_up(pl.cdiv(mf_needed, 2), 16))
    tm = max(16, _round_up(int(tm), 16))

    Mf = _round_up(mf_needed, tm)
    grid_m = Mf // tm
    total_tokens = Mf * f

    # Fold f tokens per 128-lane row.  Free view when no row padding is needed;
    # padded tail rows are sliced off at the end (they compute relu(b1)@W2+b2).
    if total_tokens == M:
        xf = x2d.reshape(Mf, W)
    else:
        xf = jnp.zeros((total_tokens, C), x2d.dtype).at[:M].set(x2d).reshape(Mf, W)

    in_size = jnp.dtype(x.dtype).itemsize
    out_size = jnp.dtype(out_dtype).itemsize

    # VMEM need: double-buffered x/out tiles + resident weights + intermediates.
    vmem_need = (
        2 * tm * W * in_size
        + 2 * tm * W * out_size
        + (W * Hf + Hf * W) * cdt_size
        + (Hf + W) * 4
        + tm * Hf * (4 + cdt_size)      # f32 h and compute-dtype h
        + tm * W * (cdt_size + 4)       # compute-dtype x and f32 y
    )
    vmem_limit = int(min(48 * 1024 * 1024, max(4 * 1024 * 1024, 2 * vmem_need)))

    # Honest cost model: true (unpadded) token count, actual bytes moved.
    cost = pl.CostEstimate(
        flops=4 * M * C * H,
        transcendentals=0,
        bytes_accessed=int(
            M * C * (in_size + out_size)
            + (W * Hf + Hf * W) * cdt_size
            + (Hf + W) * 4
        ),
    )

    out = pl.pallas_call(
        _ffn_kernel,
        out_shape=jax.ShapeDtypeStruct((Mf, W), out_dtype),
        grid_spec=pltpu.PrefetchScalarGridSpec(
            num_scalar_prefetch=0,
            grid=(grid_m,),
            in_specs=[
                pl.BlockSpec((tm, W), lambda i: (i, 0)),    # folded x tile
                pl.BlockSpec((W, Hf), lambda i: (0, 0)),    # block-diag W1 (resident)
                pl.BlockSpec((1, Hf), lambda i: (0, 0)),    # tiled b1 (f32)
                pl.BlockSpec((Hf, W), lambda i: (0, 0)),    # block-diag W2 (resident)
                pl.BlockSpec((1, W), lambda i: (0, 0)),     # tiled b2 (f32)
            ],
            out_specs=pl.BlockSpec((tm, W), lambda i: (i, 0)),
        ),
        compiler_params=pltpu.CompilerParams(
            dimension_semantics=("parallel",),   # shard M across TCs (v7x megacore)
            vmem_limit_bytes=vmem_limit,
        ),
        cost_estimate=cost,
    )(xf, params["w1"], params["b1"], params["w2"], params["b2"])

    y = out.reshape(total_tokens, C)[:M]
    return y.reshape(orig_shape)


if __name__ == "__main__":
    key = jax.random.PRNGKey(0)
    kx, k1, k2, k3, k4 = jax.random.split(key, 5)

    B, T, C = 2, 8, N_EMBD
    H = 4 * C

    x = jax.random.normal(kx, (B, T, C), dtype=jnp.float32)
    w1 = jax.random.normal(k1, (C, H), dtype=jnp.float32) * (1.0 / jnp.sqrt(C))
    b1 = jax.random.normal(k2, (H,), dtype=jnp.float32) * 0.01
    w2 = jax.random.normal(k3, (H, C), dtype=jnp.float32) * (1.0 / jnp.sqrt(H))
    b2 = jax.random.normal(k4, (C,), dtype=jnp.float32) * 0.01

    params = prepare_ffn_params(w1, b1, w2, b2)     # one-time weight prep
    out = feed_forward(x, params=params)
    out = jax.block_until_ready(out)
    assert out.shape == (B, T, C)
    assert out.dtype == x.dtype

    # Reference with the same bf16-cast + f32-accumulate recipe (tight check).
    xb = x.reshape(-1, C).astype(jnp.bfloat16)
    hb = jnp.dot(xb, w1.astype(jnp.bfloat16), preferred_element_type=jnp.float32) + b1
    hb = jnp.maximum(hb, 0.0).astype(jnp.bfloat16)
    ref_bf16 = jnp.dot(hb, w2.astype(jnp.bfloat16), preferred_element_type=jnp.float32) + b2
    ref_bf16 = ref_bf16.reshape(B, T, C)
    assert jnp.allclose(out, ref_bf16, atol=1e-2, rtol=1e-2)

    # Full-f32 PyTorch-equivalent reference (loose sanity bound for bf16 compute).
    ref_f32 = (jnp.maximum(x.reshape(-1, C) @ w1 + b1, 0.0) @ w2 + b2).reshape(B, T, C)
    assert jnp.allclose(out, ref_f32, atol=1e-1, rtol=1e-1)

    print("KERNEL_OK")
</pallas_src>

<mosaic_0001>
module attributes {stable_mosaic.version = 11 : i64} {
  func.func @_ffn_kernel(%arg0: i32, %arg1: memref<16x128xf32, #tpu.memory_space<vmem>>, %arg2: memref<128x512xbf16, #tpu.memory_space<vmem>>, %arg3: memref<1x512xf32, #tpu.memory_space<vmem>>, %arg4: memref<512x128xbf16, #tpu.memory_space<vmem>>, %arg5: memref<1x128xf32, #tpu.memory_space<vmem>>, %arg6: memref<16x128xf32, #tpu.memory_space<vmem>>) attributes {dimension_semantics = [#tpu.dimension_semantics<parallel>], iteration_bounds = array<i64: 1>, scalar_prefetch = 0 : i64, scratch_operands = 0 : i64, tpu.core_type = #tpu.core_type<tc>, window_params = [{transform_indices = @transform_0, window_bounds = array<i64: 16, 128>}, {pipeline_mode = #tpu.pipeline_mode<synchronous>, transform_indices = @transform_1, window_bounds = array<i64: 128, 512>}, {pipeline_mode = #tpu.pipeline_mode<synchronous>, transform_indices = @transform_2, window_bounds = array<i64: 1, 512>}, {pipeline_mode = #tpu.pipeline_mode<synchronous>, transform_indices = @transform_3, window_bounds = array<i64: 512, 128>}, {pipeline_mode = #tpu.pipeline_mode<synchronous>, transform_indices = @transform_4, window_bounds = array<i64: 1, 128>}, {transform_indices = @transform_5, window_bounds = array<i64: 16, 128>}]} {
    %c0 = arith.constant 0 : index
    %c0_0 = arith.constant 0 : index
    %0 = vector.load %arg1[%c0, %c0_0] : memref<16x128xf32, #tpu.memory_space<vmem>>, vector<16x128xf32>
    %1 = arith.truncf %0 : vector<16x128xf32> to vector<16x128xbf16>
    %c0_1 = arith.constant 0 : index
    %c0_2 = arith.constant 0 : index
    %2 = vector.load %arg2[%c0_1, %c0_2] : memref<128x512xbf16, #tpu.memory_space<vmem>>, vector<128x512xbf16>
    %cst = arith.constant dense<0.000000e+00> : vector<16x512xf32>
    %3 = tpu.matmul %1, %2, %cst {dimension_numbers = #tpu.dot_dimension_numbers<[1], [0], [0], [1], [0, 0, 1, 1], [], []>} : vector<16x128xbf16>, vector<128x512xbf16>, vector<16x512xf32> -> vector<16x512xf32>
    %c0_3 = arith.constant 0 : index
    %c0_4 = arith.constant 0 : index
    %4 = vector.load %arg3[%c0_3, %c0_4] : memref<1x512xf32, #tpu.memory_space<vmem>>, vector<1x512xf32>
    %5 = vector.broadcast %4 : vector<1x512xf32> to vector<16x512xf32>
    %6 = arith.addf %3, %5 : vector<16x512xf32>
    %cst_5 = arith.constant 0.000000e+00 : f32
    %7 = vector.broadcast %cst_5 : f32 to vector<16x512xf32>
    %8 = arith.maximumf %6, %7 : vector<16x512xf32>
    %9 = arith.truncf %8 : vector<16x512xf32> to vector<16x512xbf16>
    %c0_6 = arith.constant 0 : index
    %c0_7 = arith.constant 0 : index
    %10 = vector.load %arg4[%c0_6, %c0_7] : memref<512x128xbf16, #tpu.memory_space<vmem>>, vector<512x128xbf16>
    %cst_8 = arith.constant dense<0.000000e+00> : vector<16x128xf32>
    %11 = tpu.matmul %9, %10, %cst_8 {dimension_numbers = #tpu.dot_dimension_numbers<[1], [0], [0], [1], [0, 0, 1, 1], [], []>} : vector<16x512xbf16>, vector<512x128xbf16>, vector<16x128xf32> -> vector<16x128xf32>
    %c0_9 = arith.constant 0 : index
    %c0_10 = arith.constant 0 : index
    %12 = vector.load %arg5[%c0_9, %c0_10] : memref<1x128xf32, #tpu.memory_space<vmem>>, vector<1x128xf32>
    %13 = vector.broadcast %12 : vector<1x128xf32> to vector<16x128xf32>
    %14 = arith.addf %11, %13 : vector<16x128xf32>
    %c0_11 = arith.constant 0 : index
    %c0_12 = arith.constant 0 : index
    %15 = vector.load %arg6[%c0_11, %c0_12] : memref<16x128xf32, #tpu.memory_space<vmem>>, vector<16x128xf32>
    tpu.vector_store %arg6[%c0_11, %c0_12], %14 {strides = array<i32>} : memref<16x128xf32, #tpu.memory_space<vmem>>, vector<16x128xf32>,
    return
  }
  func.func @transform_0(%arg0: i32) -> (i32, i32) {
    %c0_i32 = arith.constant 0 : i32
    %c0_i32_0 = arith.constant 0 : i32
    return %arg0, %c0_i32 : i32, i32
  }
  func.func @transform_1(%arg0: i32) -> (i32, i32) {
    %c0_i32 = arith.constant 0 : i32
    %c0_i32_0 = arith.constant 0 : i32
    %c0_i32_1 = arith.constant 0 : i32
    return %c0_i32, %c0_i32_0 : i32, i32
  }
  func.func @transform_2(%arg0: i32) -> (i32, i32) {
    %c0_i32 = arith.constant 0 : i32
    %c0_i32_0 = arith.constant 0 : i32
    %c0_i32_1 = arith.constant 0 : i32
    return %c0_i32, %c0_i32_0 : i32, i32
  }
  func.func @transform_3(%arg0: i32) -> (i32, i32) {
    %c0_i32 = arith.constant 0 : i32
    %c0_i32_0 = arith.constant 0 : i32
    %c0_i32_1 = arith.constant 0 : i32
    return %c0_i32, %c0_i32_0 : i32, i32
  }
  func.func @transform_4(%arg0: i32) -> (i32, i32) {
    %c0_i32 = arith.constant 0 : i32
    %c0_i32_0 = arith.constant 0 : i32
    %c0_i32_1 = arith.constant 0 : i32
    return %c0_i32, %c0_i32_0 : i32, i32
  }
  func.func @transform_5(%arg0: i32) -> (i32, i32) {
    %c0_i32 = arith.constant 0 : i32
    %c0_i32_0 = arith.constant 0 : i32
    return %arg0, %c0_i32 : i32, i32
  }
}

</mosaic_0001>

<llo_original>
// kernel: tpu_custom_call.1
$region0: #{tpu_custom_call.1}
  #allocation0 [shape = 'u32[]', space=smem, size = 0x4, offset = 0x4, fixed_abs, tag = 'smem constant byte address 0x4 - core index']
  #allocation1 [shape = 'u32[144,128]{1,0:T(1,128)}', space=vmem, size = 0x12000, scoped, tag = 'internal scratch']
  %s0 = inlined_call_operand.hbm [shape: f32[16,128], index: 0, kind: input, shape index: {}]
  %s1 = inlined_call_operand.hbm [shape: bf16[128,512], index: 1, kind: input, shape index: {}]
  %s2 = inlined_call_operand.hbm [shape: f32[1,512], index: 2, kind: input, shape index: {}]
  %s3 = inlined_call_operand.hbm [shape: bf16[512,128], index: 3, kind: input, shape index: {}]
  %s4 = inlined_call_operand.vmem [shape: f32[1,128], index: 4, kind: input, shape index: {}]
  %s5 = inlined_call_operand.hbm [shape: f32[16,128], index: 5, kind: output, shape index: {}]
  %s6 = sld [smem:[#allocation0]]
  $region46: #{tpu_custom_call.1} parent=0
    _
  %s8 = ssub.s32 1, %s6
  %s9 = scalar_select 0, %s8, %s6
  $region1: #{tpu_custom_call.1} parent=0
    #allocation2 [shape = 'u8[8192]{0}', space=vmem, size = 0x2000, scoped, tag = 'input window, operand 0, single buffered']
    #allocation3 [shape = 's32[1]{0}', space=sflag, size = 0x4, scoped, tag = 'scoped memory for tpu_custom_call.1']
    #allocation4 [shape = 's32[1]{0}', space=sflag, size = 0x4, scoped, tag = 'scoped memory for tpu_custom_call.1']
    #allocation5 [shape = 'u8[131072]{0}', space=vmem, size = 0x20000, scoped, tag = 'input window, operand 1, single buffered']
    #allocation6 [shape = 's32[1]{0}', space=sflag, size = 0x4, scoped, tag = 'scoped memory for tpu_custom_call.1']
    #allocation7 [shape = 'u8[2048]{0}', space=vmem, size = 0x800, scoped, tag = 'input window, operand 2, single buffered']
    #allocation8 [shape = 'u8[131072]{0}', space=vmem, size = 0x20000, scoped, tag = 'input window, operand 3, single buffered']
    #allocation9 [shape = 's32[1]{0}', space=sflag, size = 0x4, scoped, tag = 'scoped memory for tpu_custom_call.1']
    #allocation10 [shape = 'u8[8192]{0}', space=vmem, size = 0x2000, scoped, tag = 'output window, operand 0, single buffered']
    %10 = vsyncpa [#allocation3], 0
    %11 = vsyncpa [#allocation6], 0
    %12 = vsyncpa [#allocation9], 0
    %13 = vsyncpa [#allocation4], 0
    // Predicated region
    $region2: #{tpu_custom_call.1} parent=1 // pred_check
      _
    $region3: #{tpu_custom_call.1} parent=1 // pred_check_branch
      %15 = sbr.rel (0) target = $region5
    $region4: #{tpu_custom_call.1} parent=1 // pred_region
      %s17 = ssub.s32 256, 256
      %18 = vsyncadd [#allocation3], %s17
      %s19 = sshll.u32 [#allocation2], 4
      %s20 = int_to_ptr.vmem [resolvable:$true] %s19
      %25 = dma.hbm_to_vmem [thread:$0]  %s0, 256, %s20, [#allocation3], 128, 128, 8
    $region5: #{tpu_custom_call.1} parent=1 // pred_fallthru
      _
    // Predicated region
    $region6: #{tpu_custom_call.1} parent=1 // pred_check
      _
    $region7: #{tpu_custom_call.1} parent=1 // pred_check_branch
      %27 = sbr.rel (0) target = $region9
    $region8: #{tpu_custom_call.1} parent=1 // pred_region
      %s29 = ssub.s32 4096, 4096
      %30 = vsyncadd [#allocation6], %s29
      %s31 = sshll.u32 [#allocation5], 4
      %s32 = int_to_ptr.vmem [resolvable:$true] %s31
      %37 = dma.hbm_to_vmem [thread:$0]  %s1, 4096, %s32, [#allocation6], 256, 256, 16
    $region9: #{tpu_custom_call.1} parent=1 // pred_fallthru
      _
    // Predicated region
    $region10: #{tpu_custom_call.1} parent=1 // pred_check
      _
    $region11: #{tpu_custom_call.1} parent=1 // pred_check_branch
      %39 = sbr.rel (0) target = $region13
    $region12: #{tpu_custom_call.1} parent=1 // pred_region
      %s41 = ssub.s32 64, 64
      %42 = vsyncadd [#allocation6], %s41
      %s44 = sshll.u32 [#allocation7], 4
      %s45 = int_to_ptr.vmem [resolvable:$true] %s44
      %47 = dma.hbm_to_vmem [thread:$0]  %s2, 64, %s45, [#allocation6]
    $region13: #{tpu_custom_call.1} parent=1 // pred_fallthru
      _
    // Predicated region
    $region14: #{tpu_custom_call.1} parent=1 // pred_check
      _
    $region15: #{tpu_custom_call.1} parent=1 // pred_check_branch
      %49 = sbr.rel (0) target = $region17
    $region16: #{tpu_custom_call.1} parent=1 // pred_region
      %s51 = ssub.s32 4096, 4096
      %52 = vsyncadd [#allocation9], %s51
      %s53 = sshll.u32 [#allocation8], 4
      %s54 = int_to_ptr.vmem [resolvable:$true] %s53
      %59 = dma.hbm_to_vmem [thread:$0]  %s3, 4096, %s54, [#allocation9], 64, 64, 4
    $region17: #{tpu_custom_call.1} parent=1 // pred_fallthru
      _
    // Predicated region
    $region18: #{tpu_custom_call.1} parent=1 // pred_check
      _
    $region19: #{tpu_custom_call.1} parent=1 // pred_check_branch
      %61 = sbr.rel (0) target = $region21
    $region20: #{tpu_custom_call.1} parent=1 // pred_region
      _
    $region21: #{tpu_custom_call.1} parent=1 // pred_fallthru
      _
    // Predicated region
    $region22: #{tpu_custom_call.1} parent=1 // pred_check
      _
    $region23: #{tpu_custom_call.1} parent=1 // pred_check_branch
      %63 = sbr.rel (0) target = $region25
    $region24: #{tpu_custom_call.1} parent=1 // pred_region
      %64 = dma.done [#allocation3], 256
    $region25: #{tpu_custom_call.1} parent=1 // pred_fallthru
      _
    // Predicated region
    $region26: #{tpu_custom_call.1} parent=1 // pred_check
      _
    $region27: #{tpu_custom_call.1} parent=1 // pred_check_branch
      %66 = sbr.rel (0) target = $region29
    $region28: #{tpu_custom_call.1} parent=1 // pred_region
      %67 = dma.done [#allocation6], 4096
    $region29: #{tpu_custom_call.1} parent=1 // pred_fallthru
      _
    // Predicated region
    $region30: #{tpu_custom_call.1} parent=1 // pred_check
      _
    $region31: #{tpu_custom_call.1} parent=1 // pred_check_branch
      %69 = sbr.rel (0) target = $region33
    $region32: #{tpu_custom_call.1} parent=1 // pred_region
      %70 = dma.done [#allocation6], 64
    $region33: #{tpu_custom_call.1} parent=1 // pred_fallthru
      _
    // Predicated region
    $region34: #{tpu_custom_call.1} parent=1 // pred_check
      _
    $region35: #{tpu_custom_call.1} parent=1 // pred_check_branch
      %72 = sbr.rel (0) target = $region37
    $region36: #{tpu_custom_call.1} parent=1 // pred_region
      %73 = dma.done [#allocation9], 4096
    $region37: #{tpu_custom_call.1} parent=1 // pred_fallthru
      _
    %v75 = vld [vmem:[#allocation2] sm:$0xff]
    %v76 = vld [vmem:[#allocation2 + $0x8] sm:$0xff]
    %v77 = vpack.c.bf16 %v76, %v75
    %v78 = vld [vmem:[#allocation5] sm:$0xff]
    %v79 = vld [vmem:[#allocation5 + $0x8] sm:$0xff]
    %v80 = vld [vmem:[#allocation5 + $0x10] sm:$0xff]
    %v81 = vld [vmem:[#allocation5 + $0x18] sm:$0xff]
    %v82 = vld [vmem:[#allocation5 + $0x20] sm:$0xff]
    %v83 = vld [vmem:[#allocation5 + $0x28] sm:$0xff]
    %v84 = vld [vmem:[#allocation5 + $0x30] sm:$0xff]
    %v85 = vld [vmem:[#allocation5 + $0x38] sm:$0xff]
    %v86 = vld [vmem:[#allocation5 + $0x40] sm:$0xff]
    %v87 = vld [vmem:[#allocation5 + $0x48] sm:$0xff]
    %v88 = vld [vmem:[#allocation5 + $0x50] sm:$0xff]
    %v89 = vld [vmem:[#allocation5 + $0x58] sm:$0xff]
    %v90 = vld [vmem:[#allocation5 + $0x60] sm:$0xff]
    %v91 = vld [vmem:[#allocation5 + $0x68] sm:$0xff]
    %v92 = vld [vmem:[#allocation5 + $0x70] sm:$0xff]
    %v93 = vld [vmem:[#allocation5 + $0x78] sm:$0xff]
    %v94 = vld [vmem:[#allocation5 + $0x80] sm:$0xff]
    %v95 = vld [vmem:[#allocation5 + $0x88] sm:$0xff]
    %v96 = vld [vmem:[#allocation5 + $0x90] sm:$0xff]
    %v97 = vld [vmem:[#allocation5 + $0x98] sm:$0xff]
    %v98 = vld [vmem:[#allocation5 + $0xa0] sm:$0xff]
    %v99 = vld [vmem:[#allocation5 + $0xa8] sm:$0xff]
    %v100 = vld [vmem:[#allocation5 + $0xb0] sm:$0xff]
    %v101 = vld [vmem:[#allocation5 + $0xb8] sm:$0xff]
    %v102 = vld [vmem:[#allocation5 + $0xc0] sm:$0xff]
    %v103 = vld [vmem:[#allocation5 + $0xc8] sm:$0xff]
    %v104 = vld [vmem:[#allocation5 + $0xd0] sm:$0xff]
    %v105 = vld [vmem:[#allocation5 + $0xd8] sm:$0xff]
    %v106 = vld [vmem:[#allocation5 + $0xe0] sm:$0xff]
    %v107 = vld [vmem:[#allocation5 + $0xe8] sm:$0xff]
    %v108 = vld [vmem:[#allocation5 + $0xf0] sm:$0xff]
    %v109 = vld [vmem:[#allocation5 + $0xf8] sm:$0xff]
    %v110 = vld [vmem:[#allocation7] sm:$0xf]
    %v112 = vlaneseq
    %v113 = vshrl.u32 %v112, 7
    %v114 = vsub.s32 0, %v113
    %v115 = vrot.slane %v110, %v114
    %v116 = vlaneseq
    %v117 = vshrl.u32 %v116, 7
    %v118 = vsub.s32 1, %v117
    %v119 = vrot.slane %v110, %v118
    %v120 = vlaneseq
    %v121 = vshrl.u32 %v120, 7
    %v122 = vsub.s32 2, %v121
    %v123 = vrot.slane %v110, %v122
    %v124 = vlaneseq
    %v125 = vshrl.u32 %v124, 7
    %v126 = vsub.s32 3, %v125
    %v127 = vrot.slane %v110, %v126
    %v164 = vunpack.c.l.b16 %v78
    %v165 = vunpack.c.h.b16 %v78
    %v166 = vunpack.c.l.b16 %v79
    %v167 = vunpack.c.h.b16 %v79
    %v168 = vunpack.c.l.b16 %v80
    %v169 = vunpack.c.h.b16 %v80
    %v170 = vunpack.c.l.b16 %v81
    %v171 = vunpack.c.h.b16 %v81
    %v172 = vunpack.c.l.b16 %v82
    %v173 = vunpack.c.h.b16 %v82
    %v174 = vunpack.c.l.b16 %v83
    %v175 = vunpack.c.h.b16 %v83
    %v176 = vunpack.c.l.b16 %v84
    %v177 = vunpack.c.h.b16 %v84
    %v178 = vunpack.c.l.b16 %v85
    %v179 = vunpack.c.h.b16 %v85
    %v180 = vunpack.c.l.b16 %v86
    %v181 = vunpack.c.h.b16 %v86
    %v182 = vunpack.c.l.b16 %v87
    %v183 = vunpack.c.h.b16 %v87
    %v184 = vunpack.c.l.b16 %v88
    %v185 = vunpack.c.h.b16 %v88
    %v186 = vunpack.c.l.b16 %v89
    %v187 = vunpack.c.h.b16 %v89
    %v188 = vunpack.c.l.b16 %v90
    %v189 = vunpack.c.h.b16 %v90
    %v190 = vunpack.c.l.b16 %v91
    %v191 = vunpack.c.h.b16 %v91
    %v192 = vunpack.c.l.b16 %v92
    %v193 = vunpack.c.h.b16 %v92
    %v194 = vunpack.c.l.b16 %v93
    %v195 = vunpack.c.h.b16 %v93
    %v196 = vunpack.c.l.b16 %v94
    %v197 = vunpack.c.h.b16 %v94
    %v198 = vunpack.c.l.b16 %v95
    %v199 = vunpack.c.h.b16 %v95
    %v200 = vunpack.c.l.b16 %v96
    %v201 = vunpack.c.h.b16 %v96
    %v202 = vunpack.c.l.b16 %v97
    %v203 = vunpack.c.h.b16 %v97
    %v204 = vunpack.c.l.b16 %v98
    %v205 = vunpack.c.h.b16 %v98
    %v206 = vunpack.c.l.b16 %v99
    %v207 = vunpack.c.h.b16 %v99
    %v208 = vunpack.c.l.b16 %v100
    %v209 = vunpack.c.h.b16 %v100
    %v210 = vunpack.c.l.b16 %v101
    %v211 = vunpack.c.h.b16 %v101
    %v212 = vunpack.c.l.b16 %v102
    %v213 = vunpack.c.h.b16 %v102
    %v214 = vunpack.c.l.b16 %v103
    %v215 = vunpack.c.h.b16 %v103
    %v216 = vunpack.c.l.b16 %v104
    %v217 = vunpack.c.h.b16 %v104
    %v218 = vunpack.c.l.b16 %v105
    %v219 = vunpack.c.h.b16 %v105
    %v220 = vunpack.c.l.b16 %v106
    %v221 = vunpack.c.h.b16 %v106
    %v222 = vunpack.c.l.b16 %v107
    %v223 = vunpack.c.h.b16 %v107
    %v224 = vunpack.c.l.b16 %v108
    %v225 = vunpack.c.h.b16 %v108
    %v226 = vunpack.c.l.b16 %v109
    %v227 = vunpack.c.h.b16 %v109
    %v228 = vpack.c.b16 %v168, %v164
    %v229 = vpack.c.b16 %v169, %v165
    %v230 = vpack.c.b16 %v170, %v166
    %v231 = vpack.c.b16 %v171, %v167
    %v232 = vpack.c.b16 %v176, %v172
    %v233 = vpack.c.b16 %v177, %v173
    %v234 = vpack.c.b16 %v178, %v174
    %v235 = vpack.c.b16 %v179, %v175
    %v236 = vpack.c.b16 %v184, %v180
    %v237 = vpack.c.b16 %v185, %v181
    %v238 = vpack.c.b16 %v186, %v182
    %v239 = vpack.c.b16 %v187, %v183
    %v240 = vpack.c.b16 %v192, %v188
    %v241 = vpack.c.b16 %v193, %v189
    %v242 = vpack.c.b16 %v194, %v190
    %v243 = vpack.c.b16 %v195, %v191
    %v244 = vpack.c.b16 %v200, %v196
    %v245 = vpack.c.b16 %v201, %v197
    %v246 = vpack.c.b16 %v202, %v198
    %v247 = vpack.c.b16 %v203, %v199
    %v248 = vpack.c.b16 %v208, %v204
    %v249 = vpack.c.b16 %v209, %v205
    %v250 = vpack.c.b16 %v210, %v206
    %v251 = vpack.c.b16 %v211, %v207
    %v252 = vpack.c.b16 %v216, %v212
    %v253 = vpack.c.b16 %v217, %v213
    %v254 = vpack.c.b16 %v218, %v214
    %v255 = vpack.c.b16 %v219, %v215
    %v256 = vpack.c.b16 %v224, %v220
    %v257 = vpack.c.b16 %v225, %v221
    %v258 = vpack.c.b16 %v226, %v222
    %v259 = vpack.c.b16 %v227, %v223
    %292 = vmatprep.subr.bf16.mxu0 %v257
    %293 = vmatpush1.bf16.msra.mxu0 %v256
    %294 = vmatprep.subr.bf16.mxu0 %v253
    %295 = vmatpush1.bf16.msra.mxu0 %v252
    %296 = vmatprep.subr.bf16.mxu0 %v249
    %297 = vmatpush1.bf16.msra.mxu0 %v248
    %298 = vmatprep.subr.bf16.mxu0 %v245
    %299 = vmatpush1.bf16.msra.mxu0 %v244
    %300 = vmatprep.subr.bf16.mxu0 %v241
    %301 = vmatpush1.bf16.msra.mxu0 %v240
    %302 = vmatprep.subr.bf16.mxu0 %v237
    %303 = vmatpush1.bf16.msra.mxu0 %v236
    %304 = vmatprep.subr.bf16.mxu0 %v233
    %305 = vmatpush1.bf16.msra.mxu0 %v232
    %306 = vmatprep.subr.bf16.mxu0 %v229
    %307 = vmatpush1.bf16.msra.mxu0 %v228
    %308 = vmatprep.subr.bf16.mxu0 0
    %309 = vmatpush2.bf16.msra.mxu0 0
    %310 = vmatprep.subr.bf16.mxu0 0
    %311 = vmatpush2.bf16.msra.mxu0 0
    %312 = vmatprep.subr.bf16.mxu0 0
    %313 = vmatpush2.bf16.msra.mxu0 0
    %314 = vmatprep.subr.bf16.mxu0 0
    %315 = vmatpush2.bf16.msra.mxu0 0
    %316 = vmatprep.subr.bf16.mxu0 0
    %317 = vmatpush2.bf16.msra.mxu0 0
    %318 = vmatprep.subr.bf16.mxu0 0
    %319 = vmatpush2.bf16.msra.mxu0 0
    %320 = vmatprep.subr.bf16.mxu0 0
    %321 = vmatpush2.bf16.msra.mxu0 0
    %322 = vmatprep.subr.bf16.mxu0 0
    %323 = vmatpush2.bf16.msra.mxu0 0
    %324 = vmatprep.mubr.bf16.mxu0 0
    %325 = vmatmul.mubr.bf16.gmra.mxu0 %v77
    %v326 = vpop.f32.mrf.mxu0
    %v327 = vadd.f32 %v115, %v326
    %v328 = vpop.f32.mrf.mxu0
    %v329 = vadd.f32 %v119, %v328
    %v330 = vpop.f32.mrf.mxu0
    %v331 = vadd.f32 %v115, %v330
    %v332 = vpop.f32.mrf.mxu0
    %v333 = vadd.f32 %v119, %v332
    %334 = vdwg.mxu0
    %335 = vmatprep.subr.bf16.mxu0 %v259
    %336 = vmatpush1.bf16.msra.mxu0 %v258
    %337 = vmatprep.subr.bf16.mxu0 %v255
    %338 = vmatpush1.bf16.msra.mxu0 %v254
    %339 = vmatprep.subr.bf16.mxu0 %v251
    %340 = vmatpush1.bf16.msra.mxu0 %v250
    %341 = vmatprep.subr.bf16.mxu0 %v247
    %342 = vmatpush1.bf16.msra.mxu0 %v246
    %343 = vmatprep.subr.bf16.mxu0 %v243
    %344 = vmatpush1.bf16.msra.mxu0 %v242
    %345 = vmatprep.subr.bf16.mxu0 %v239
    %346 = vmatpush1.bf16.msra.mxu0 %v238
    %347 = vmatprep.subr.bf16.mxu0 %v235
    %348 = vmatpush1.bf16.msra.mxu0 %v234
    %349 = vmatprep.subr.bf16.mxu0 %v231
    %350 = vmatpush1.bf16.msra.mxu0 %v230
    %351 = vmatprep.subr.bf16.mxu0 0
    %352 = vmatpush2.bf16.msra.mxu0 0
    %353 = vmatprep.subr.bf16.mxu0 0
    %354 = vmatpush2.bf16.msra.mxu0 0
    %355 = vmatprep.subr.bf16.mxu0 0
    %356 = vmatpush2.bf16.msra.mxu0 0
    %357 = vmatprep.subr.bf16.mxu0 0
    %358 = vmatpush2.bf16.msra.mxu0 0
    %359 = vmatprep.subr.bf16.mxu0 0
    %360 = vmatpush2.bf16.msra.mxu0 0
    %361 = vmatprep.subr.bf16.mxu0 0
    %362 = vmatpush2.bf16.msra.mxu0 0
    %363 = vmatprep.subr.bf16.mxu0 0
    %364 = vmatpush2.bf16.msra.mxu0 0
    %365 = vmatprep.subr.bf16.mxu0 0
    %366 = vmatpush2.bf16.msra.mxu0 0
    %367 = vmatprep.mubr.bf16.mxu0 0
    %368 = vmatmul.mubr.bf16.gmra.mxu0 %v77
    %v369 = vpop.f32.mrf.mxu0
    %v370 = vadd.f32 %v123, %v369
    %v371 = vpop.f32.mrf.mxu0
    %v372 = vadd.f32 %v127, %v371
    %v373 = vpop.f32.mrf.mxu0
    %v374 = vadd.f32 %v123, %v373
    %v375 = vpop.f32.mrf.mxu0
    %v376 = vadd.f32 %v127, %v375
    %377 = vdwg.mxu0
    %v378 = vmax.f32 %v327, 0.0
    %v379 = vmax.f32 %v329, 0.0
    %v380 = vmax.f32 %v370, 0.0
    %v381 = vmax.f32 %v372, 0.0
    %v382 = vmax.f32 %v331, 0.0
    %v383 = vmax.f32 %v333, 0.0
    %v384 = vmax.f32 %v374, 0.0
    %v385 = vmax.f32 %v376, 0.0
    %v386 = vpack.c.bf16 %v382, %v378
    %v387 = vpack.c.bf16 %v383, %v379
    %v388 = vpack.c.bf16 %v384, %v380
    %v389 = vpack.c.bf16 %v385, %v381
    %v390 = vld [vmem:[#allocation8] sm:$0xf]
    %v391 = vld [vmem:[#allocation8 + $0x4] sm:$0xf]
    %v392 = vld [vmem:[#allocation8 + $0x8] sm:$0xf]
    %v393 = vld [vmem:[#allocation8 + $0xc] sm:$0xf]
    %v394 = vld [vmem:[#allocation8 + $0x10] sm:$0xf]
    %v395 = vld [vmem:[#allocation8 + $0x14] sm:$0xf]
    %v396 = vld [vmem:[#allocation8 + $0x18] sm:$0xf]
    %v397 = vld [vmem:[#allocation8 + $0x1c] sm:$0xf]
    %v398 = vld [vmem:[#allocation8 + $0x20] sm:$0xf]
    %v399 = vld [vmem:[#allocation8 + $0x24] sm:$0xf]
    %v400 = vld [vmem:[#allocation8 + $0x28] sm:$0xf]
    %v401 = vld [vmem:[#allocation8 + $0x2c] sm:$0xf]
    %v402 = vld [vmem:[#allocation8 + $0x30] sm:$0xf]
    %v403 = vld [vmem:[#allocation8 + $0x34] sm:$0xf]
    %v404 = vld [vmem:[#allocation8 + $0x38] sm:$0xf]
    %v405 = vld [vmem:[#allocation8 + $0x3c] sm:$0xf]
    %v406 = vld [vmem:[#allocation8 + $0x40] sm:$0xf]
    %v407 = vld [vmem:[#allocation8 + $0x44] sm:$0xf]
    %v408 = vld [vmem:[#allocation8 + $0x48] sm:$0xf]
    %v409 = vld [vmem:[#allocation8 + $0x4c] sm:$0xf]
    %v410 = vld [vmem:[#allocation8 + $0x50] sm:$0xf]
    %v411 = vld [vmem:[#allocation8 + $0x54] sm:$0xf]
    %v412 = vld [vmem:[#allocation8 + $0x58] sm:$0xf]
    %v413 = vld [vmem:[#allocation8 + $0x5c] sm:$0xf]
    %v414 = vld [vmem:[#allocation8 + $0x60] sm:$0xf]
    %v415 = vld [vmem:[#allocation8 + $0x64] sm:$0xf]
    %v416 = vld [vmem:[#allocation8 + $0x68] sm:$0xf]
    %v417 = vld [vmem:[#allocation8 + $0x6c] sm:$0xf]
    %v418 = vld [vmem:[#allocation8 + $0x70] sm:$0xf]
    %v419 = vld [vmem:[#allocation8 + $0x74] sm:$0xf]
    %v420 = vld [vmem:[#allocation8 + $0x78] sm:$0xf]
    %v421 = vld [vmem:[#allocation8 + $0x7c] sm:$0xf]
    %v422 = vld [vmem:[#allocation8 + $0x80] sm:$0xf]
    %v423 = vld [vmem:[#allocation8 + $0x84] sm:$0xf]
    %v424 = vld [vmem:[#allocation8 + $0x88] sm:$0xf]
    %v425 = vld [vmem:[#allocation8 + $0x8c] sm:$0xf]
    %v426 = vld [vmem:[#allocation8 + $0x90] sm:$0xf]
    %v427 = vld [vmem:[#allocation8 + $0x94] sm:$0xf]
    %v428 = vld [vmem:[#allocation8 + $0x98] sm:$0xf]
    %v429 = vld [vmem:[#allocation8 + $0x9c] sm:$0xf]
    %v430 = vld [vmem:[#allocation8 + $0xa0] sm:$0xf]
    %v431 = vld [vmem:[#allocation8 + $0xa4] sm:$0xf]
    %v432 = vld [vmem:[#allocation8 + $0xa8] sm:$0xf]
    %v433 = vld [vmem:[#allocation8 + $0xac] sm:$0xf]
    %v434 = vld [vmem:[#allocation8 + $0xb0] sm:$0xf]
    %v435 = vld [vmem:[#allocation8 + $0xb4] sm:$0xf]
    %v436 = vld [vmem:[#allocation8 + $0xb8] sm:$0xf]
    %v437 = vld [vmem:[#allocation8 + $0xbc] sm:$0xf]
    %v438 = vld [vmem:[#allocation8 + $0xc0] sm:$0xf]
    %v439 = vld [vmem:[#allocation8 + $0xc4] sm:$0xf]
    %v440 = vld [vmem:[#allocation8 + $0xc8] sm:$0xf]
    %v441 = vld [vmem:[#allocation8 + $0xcc] sm:$0xf]
    %v442 = vld [vmem:[#allocation8 + $0xd0] sm:$0xf]
    %v443 = vld [vmem:[#allocation8 + $0xd4] sm:$0xf]
    %v444 = vld [vmem:[#allocation8 + $0xd8] sm:$0xf]
    %v445 = vld [vmem:[#allocation8 + $0xdc] sm:$0xf]
    %v446 = vld [vmem:[#allocation8 + $0xe0] sm:$0xf]
    %v447 = vld [vmem:[#allocation8 + $0xe4] sm:$0xf]
    %v448 = vld [vmem:[#allocation8 + $0xe8] sm:$0xf]
    %v449 = vld [vmem:[#allocation8 + $0xec] sm:$0xf]
    %v450 = vld [vmem:[#allocation8 + $0xf0] sm:$0xf]
    %v451 = vld [vmem:[#allocation8 + $0xf4] sm:$0xf]
    %v452 = vld [vmem:[#allocation8 + $0xf8] sm:$0xf]
    %v453 = vld [vmem:[#allocation8 + $0xfc] sm:$0xf]
    %v454 = vld [vmem:[%s4] sm:$0x1]
    %v456 = vlaneseq
    %v457 = vshrl.u32 %v456, 7
    %v458 = vsub.s32 0, %v457
    %v459 = vrot.slane %v454, %v458
    %v525 = vunpack.c.l.b16 %v390
    %v526 = vunpack.c.l.b16 %v391
    %v527 = vunpack.c.l.b16 %v392
    %v528 = vunpack.c.l.b16 %v393
    %v529 = vunpack.c.l.b16 %v394
    %v530 = vunpack.c.l.b16 %v395
    %v531 = vunpack.c.l.b16 %v396
    %v532 = vunpack.c.l.b16 %v397
    %v533 = vunpack.c.l.b16 %v398
    %v534 = vunpack.c.l.b16 %v399
    %v535 = vunpack.c.l.b16 %v400
    %v536 = vunpack.c.l.b16 %v401
    %v537 = vunpack.c.l.b16 %v402
    %v538 = vunpack.c.l.b16 %v403
    %v539 = vunpack.c.l.b16 %v404
    %v540 = vunpack.c.l.b16 %v405
    %v541 = vunpack.c.l.b16 %v406
    %v542 = vunpack.c.l.b16 %v407
    %v543 = vunpack.c.l.b16 %v408
    %v544 = vunpack.c.l.b16 %v409
    %v545 = vunpack.c.l.b16 %v410
    %v546 = vunpack.c.l.b16 %v411
    %v547 = vunpack.c.l.b16 %v412
    %v548 = vunpack.c.l.b16 %v413
    %v549 = vunpack.c.l.b16 %v414
    %v550 = vunpack.c.l.b16 %v415
    %v551 = vunpack.c.l.b16 %v416
    %v552 = vunpack.c.l.b16 %v417
    %v553 = vunpack.c.l.b16 %v418
    %v554 = vunpack.c.l.b16 %v419
    %v555 = vunpack.c.l.b16 %v420
    %v556 = vunpack.c.l.b16 %v421
    %v557 = vunpack.c.l.b16 %v422
    %v558 = vunpack.c.l.b16 %v423
    %v559 = vunpack.c.l.b16 %v424
    %v560 = vunpack.c.l.b16 %v425
    %v561 = vunpack.c.l.b16 %v426
    %v562 = vunpack.c.l.b16 %v427
    %v563 = vunpack.c.l.b16 %v428
    %v564 = vunpack.c.l.b16 %v429
    %v565 = vunpack.c.l.b16 %v430
    %v566 = vunpack.c.l.b16 %v431
    %v567 = vunpack.c.l.b16 %v432
    %v568 = vunpack.c.l.b16 %v433
    %v569 = vunpack.c.l.b16 %v434
    %v570 = vunpack.c.l.b16 %v435
    %v571 = vunpack.c.l.b16 %v436
    %v572 = vunpack.c.l.b16 %v437
    %v573 = vunpack.c.l.b16 %v438
    %v574 = vunpack.c.l.b16 %v439
    %v575 = vunpack.c.l.b16 %v440
    %v576 = vunpack.c.l.b16 %v441
    %v577 = vunpack.c.l.b16 %v442
    %v578 = vunpack.c.l.b16 %v443
    %v579 = vunpack.c.l.b16 %v444
    %v580 = vunpack.c.l.b16 %v445
    %v581 = vunpack.c.l.b16 %v446
    %v582 = vunpack.c.l.b16 %v447
    %v583 = vunpack.c.l.b16 %v448
    %v584 = vunpack.c.l.b16 %v449
    %v585 = vunpack.c.l.b16 %v450
    %v586 = vunpack.c.l.b16 %v451
    %v587 = vunpack.c.l.b16 %v452
    %v588 = vunpack.c.l.b16 %v453
    %v589 = vpack.c.b16 %v526, %v525
    %v590 = vpack.c.b16 %v528, %v527
    %v591 = vpack.c.b16 %v530, %v529
    %v592 = vpack.c.b16 %v532, %v531
    %v593 = vpack.c.b16 %v534, %v533
    %v594 = vpack.c.b16 %v536, %v535
    %v595 = vpack.c.b16 %v538, %v537
    %v596 = vpack.c.b16 %v540, %v539
    %v597 = vpack.c.b16 %v542, %v541
    %v598 = vpack.c.b16 %v544, %v543
    %v599 = vpack.c.b16 %v546, %v545
    %v600 = vpack.c.b16 %v548, %v547
    %v601 = vpack.c.b16 %v550, %v549
    %v602 = vpack.c.b16 %v552, %v551
    %v603 = vpack.c.b16 %v554, %v553
    %v604 = vpack.c.b16 %v556, %v555
    %v605 = vpack.c.b16 %v558, %v557
    %v606 = vpack.c.b16 %v560, %v559
    %v607 = vpack.c.b16 %v562, %v561
    %v608 = vpack.c.b16 %v564, %v563
    %v609 = vpack.c.b16 %v566, %v565
    %v610 = vpack.c.b16 %v568, %v567
    %v611 = vpack.c.b16 %v570, %v569
    %v612 = vpack.c.b16 %v572, %v571
    %v613 = vpack.c.b16 %v574, %v573
    %v614 = vpack.c.b16 %v576, %v575
    %v615 = vpack.c.b16 %v578, %v577
    %v616 = vpack.c.b16 %v580, %v579
    %v617 = vpack.c.b16 %v582, %v581
    %v618 = vpack.c.b16 %v584, %v583
    %v619 = vpack.c.b16 %v586, %v585
    %v620 = vpack.c.b16 %v588, %v587
    %653 = vmatprep.subr.bf16.mxu0 0
    %654 = vmatpush1.bf16.msra.mxu0 %v596
    %655 = vmatprep.subr.bf16.mxu0 0
    %656 = vmatpush1.bf16.msra.mxu0 %v595
    %657 = vmatprep.subr.bf16.mxu0 0
    %658 = vmatpush1.bf16.msra.mxu0 %v594
    %659 = vmatprep.subr.bf16.mxu0 0
    %660 = vmatpush1.bf16.msra.mxu0 %v593
    %661 = vmatprep.subr.bf16.mxu0 0
    %662 = vmatpush1.bf16.msra.mxu0 %v592
    %663 = vmatprep.subr.bf16.mxu0 0
    %664 = vmatpush1.bf16.msra.mxu0 %v591
    %665 = vmatprep.subr.bf16.mxu0 0
    %666 = vmatpush1.bf16.msra.mxu0 %v590
    %667 = vmatprep.subr.bf16.mxu0 0
    %668 = vmatpush1.bf16.msra.mxu0 %v589
    %669 = vmatprep.subr.bf16.mxu0 0
    %670 = vmatpush2.bf16.msra.mxu0 %v604
    %671 = vmatprep.subr.bf16.mxu0 0
    %672 = vmatpush2.bf16.msra.mxu0 %v603
    %673 = vmatprep.subr.bf16.mxu0 0
    %674 = vmatpush2.bf16.msra.mxu0 %v602
    %675 = vmatprep.subr.bf16.mxu0 0
    %676 = vmatpush2.bf16.msra.mxu0 %v601
    %677 = vmatprep.subr.bf16.mxu0 0
    %678 = vmatpush2.bf16.msra.mxu0 %v600
    %679 = vmatprep.subr.bf16.mxu0 0
    %680 = vmatpush2.bf16.msra.mxu0 %v599
    %681 = vmatprep.subr.bf16.mxu0 0
    %682 = vmatpush2.bf16.msra.mxu0 %v598
    %683 = vmatprep.subr.bf16.mxu0 0
    %684 = vmatpush2.bf16.msra.mxu0 %v597
    %685 = vmatprep.mubr.bf16.mxu0 %v387
    %686 = vmatmul.mubr.bf16.gmra.mxu0 %v386
    %v687 = vpop.f32.mrf.mxu0
    %v688 = vadd.f32 %v459, %v687
    %v689 = vpop.f32.mrf.mxu0
    %v690 = vpop.f32.mrf.mxu0
    %v691 = vadd.f32 %v459, %v690
    %v692 = vpop.f32.mrf.mxu0
    %693 = vdwg.mxu0
    %694 = vmatprep.subr.bf16.mxu0 0
    %695 = vmatpush1.bf16.msra.mxu0 %v612
    %696 = vmatprep.subr.bf16.mxu0 0
    %697 = vmatpush1.bf16.msra.mxu0 %v611
    %698 = vmatprep.subr.bf16.mxu0 0
    %699 = vmatpush1.bf16.msra.mxu0 %v610
    %700 = vmatprep.subr.bf16.mxu0 0
    %701 = vmatpush1.bf16.msra.mxu0 %v609
    %702 = vmatprep.subr.bf16.mxu0 0
    %703 = vmatpush1.bf16.msra.mxu0 %v608
    %704 = vmatprep.subr.bf16.mxu0 0
    %705 = vmatpush1.bf16.msra.mxu0 %v607
    %706 = vmatprep.subr.bf16.mxu0 0
    %707 = vmatpush1.bf16.msra.mxu0 %v606
    %708 = vmatprep.subr.bf16.mxu0 0
    %709 = vmatpush1.bf16.msra.mxu0 %v605
    %710 = vmatprep.subr.bf16.mxu0 0
    %711 = vmatpush2.bf16.msra.mxu0 %v620
    %712 = vmatprep.subr.bf16.mxu0 0
    %713 = vmatpush2.bf16.msra.mxu0 %v619
    %714 = vmatprep.subr.bf16.mxu0 0
    %715 = vmatpush2.bf16.msra.mxu0 %v618
    %716 = vmatprep.subr.bf16.mxu0 0
    %717 = vmatpush2.bf16.msra.mxu0 %v617
    %718 = vmatprep.subr.bf16.mxu0 0
    %719 = vmatpush2.bf16.msra.mxu0 %v616
    %720 = vmatprep.subr.bf16.mxu0 0
    %721 = vmatpush2.bf16.msra.mxu0 %v615
    %722 = vmatprep.subr.bf16.mxu0 0
    %723 = vmatpush2.bf16.msra.mxu0 %v614
    %724 = vmatprep.subr.bf16.mxu0 0
    %725 = vmatpush2.bf16.msra.mxu0 %v613
    %726 = vmatprep.mubr.bf16.mxu0 %v389
    %727 = vmatmul.mubr.bf16.gmra.mxu0 %v388
    %v728 = vpop.f32.mrf.mxu0
    %v729 = vadd.f32 %v688, %v728
    %v730 = vpop.f32.mrf.mxu0
    %v731 = vpop.f32.mrf.mxu0
    %v732 = vadd.f32 %v691, %v731
    %v733 = vpop.f32.mrf.mxu0
    %734 = vdwg.mxu0
    %735 = vst [vmem:[#allocation10] sm:$0xff] %v729
    %736 = vst [vmem:[#allocation10 + $0x8] sm:$0xff] %v732
    // Predicated region
    $region38: #{tpu_custom_call.1} parent=1 // pred_check
      _
    $region39: #{tpu_custom_call.1} parent=1 // pred_check_branch
      %738 = sbr.rel (0) target = $region41
    $region40: #{tpu_custom_call.1} parent=1 // pred_region
      %s740 = ssub.s32 256, 256
      %741 = vsyncadd [#allocation4], %s740
      %s742 = sshll.u32 [#allocation10], 4
      %s743 = int_to_ptr.vmem [resolvable:$true] %s742
      %748 = dma.vmem_to_hbm [thread:$0]  %s743, 256, %s5, [#allocation4], 128, 128, 8
    $region41: #{tpu_custom_call.1} parent=1 // pred_fallthru
      _
    // Predicated region
    $region42: #{tpu_custom_call.1} parent=1 // pred_check
      _
    $region43: #{tpu_custom_call.1} parent=1 // pred_check_branch
      %750 = sbr.rel (0) target = $region45
    $region44: #{tpu_custom_call.1} parent=1 // pred_region
      %751 = dma.done [#allocation4], 256
    $region45: #{tpu_custom_call.1} parent=1 // pred_fallthru
      _
    %752 = vsyncpa [#allocation3], 1
    %753 = vsyncpa [#allocation6], 1
    %754 = vsyncpa [#allocation9], 1
    %755 = vsyncpa [#allocation4], 1

</llo_original>
